<compile_context>
chip_gen: v5e
topology: v5e:2x2
jax: 0.10.0
libtpu: 0.0.40
codegen_flags: <defaults>
</compile_context>

<pallas_src>
import functools

import jax
import jax.numpy as jnp
from jax.experimental import pallas as pl
from jax.experimental.pallas import tpu as pltpu


# --------------------------------------------------------------------------
# Kernel
# --------------------------------------------------------------------------
def _mlp_kernel(*refs, depth: int, bb: int, op_dtype):
    # refs = (x_ref, W_1, b_1, ..., W_depth, b_depth, o_ref)
    x_ref = refs[0]
    param_refs = refs[1:1 + 2 * depth]
    o_ref = refs[1 + 2 * depth]

    for i in range(bb):                       # static unroll over folded batch
        h = x_ref[i].astype(op_dtype)         # (C_in, tn)
        for l in range(depth):
            w = param_refs[2 * l][...].astype(op_dtype)        # (C_l, C_{l-1})
            b = param_refs[2 * l + 1][...].astype(jnp.float32)  # (C_l, 1)
            acc = jnp.dot(w, h, preferred_element_type=jnp.float32) + b
            acc = jnp.maximum(acc, 0.0)        # ReLU (f32 epilogue)
            # Next layer's MXU operand in the native operand width.
            h = acc if l == depth - 1 else acc.astype(op_dtype)
        o_ref[i] = h.astype(o_ref.dtype)


# --------------------------------------------------------------------------
# Tiling plan
# --------------------------------------------------------------------------
def _round_up(x: int, m: int) -> int:
    return ((x + m - 1) // m) * m


def _vmem_capacity_bytes() -> int:
    try:
        return int(pltpu.get_tpu_info().vmem_capacity_bytes)
    except Exception:
        return 64 * 1024 * 1024   # conservative: v7x per-TC physical VMEM


def _largest_div_multiple_of_128(n: int, cap: int) -> int:
    """Largest divisor of n (n % 128 == 0) that is a multiple of 128 and <= cap."""
    cap = max(128, cap - cap % 128)
    t = min(cap, n)
    t -= t % 128
    while t >= 128:
        if n % t == 0:
            return t
        t -= 128
    return 128


def _plan_tiling(B, C_in, C_hid, C_out, N_pad, in_bytes, out_bytes, param_bytes):
    """Pick (lane tile tn, batch fold bb, vmem_limit_bytes) from VMEM budget."""
    phys = _vmem_capacity_bytes()
    vmem_limit = int(phys * 0.70)             # well above the scoped default
    budget = vmem_limit // 2                  # <=50% of the limit per step

    # Per-lane, per-batch-element bytes for one grid step: double-buffered
    # input + output blocks plus two live f32 layer intermediates.
    per_lane = 2 * C_in * in_bytes + 2 * C_out * out_bytes + 2 * C_hid * 4
    avail = max(budget - 2 * param_bytes, per_lane * 128)
    max_lanes = max(128, avail // per_lane)

    tn = _largest_div_multiple_of_128(N_pad, max_lanes)

    bb = 1
    if tn == N_pad and B > 1:
        # Small-D regime: fold batch elements into one block to widen DMAs and
        # amortize per-step overhead, while keeping >= 2 grid steps (megacore).
        bb_cap = max(1, min(max_lanes // N_pad, B // 2))
        for d in range(int(bb_cap), 0, -1):
            if B % d == 0:
                bb = d
                break
    return tn, bb, vmem_limit


# --------------------------------------------------------------------------
# Wrapper
# --------------------------------------------------------------------------
def equi2to2_only_mlp(x, weights, biases):
    """Pallas forward of Equi2to2onlyMLP.

    x:        (B, C_in, D, D)
    weights:  list of depth_of_mlp arrays; weights[0]:(C_out,C_in),
              weights[l>0]:(C_out,C_out)   (1x1 Conv2d weight, squeezed)
    biases:   list of depth_of_mlp arrays; each (C_l,)
    returns:  (B, C_out, D, D)
    """
    B, C_in, D, D2 = x.shape
    assert D == D2, "last two dims must be equal"
    depth = len(weights)
    assert depth >= 1 and len(biases) == depth
    C_out = weights[-1].shape[0]
    C_hid = max([C_in] + [w.shape[0] for w in weights])

    N = D * D
    N_pad = _round_up(N, 128)                 # lane-dense stores for any D

    # Channel-major, spatial flattened (contiguous reshape, no transpose).
    x_flat = x.reshape(B, C_in, N)
    if N_pad != N:
        x_flat = jnp.pad(x_flat, ((0, 0), (0, 0), (0, N_pad - N)))

    in_bytes = jnp.dtype(x.dtype).itemsize
    out_bytes = in_bytes
    param_bytes = sum(int(w.size) * 4 + int(w.shape[0]) * 4 for w in weights)

    tn, bb, vmem_limit = _plan_tiling(
        B, C_in, C_hid, C_out, N_pad, in_bytes, out_bytes, param_bytes)
    grid = (B // bb, N_pad // tn)

    # bf16 inputs stay bf16 on the MXU (f32 accumulation); otherwise f32.
    op_dtype = jnp.bfloat16 if x.dtype == jnp.bfloat16 else jnp.float32

    params = []
    in_specs = [pl.BlockSpec((bb, C_in, tn), lambda b, n: (b, 0, n))]
    for w, bvec in zip(weights, biases):
        b2d = bvec.reshape(w.shape[0], 1)
        params.append(w)
        params.append(b2d)
        # Tiny full-array blocks with constant index_map: VMEM-resident.
        in_specs.append(pl.BlockSpec(w.shape, lambda b, n: (0, 0)))
        in_specs.append(pl.BlockSpec(b2d.shape, lambda b, n: (0, 0)))

    # Advisory cost estimate for XLA's scheduler.
    flops = 0
    c_prev = C_in
    for w in weights:
        flops += 2 * int(w.shape[0]) * c_prev * B * N_pad
        c_prev = int(w.shape[0])
    bytes_accessed = (B * C_in * N_pad * in_bytes
                      + B * C_out * N_pad * out_bytes
                      + param_bytes)

    out_flat = pl.pallas_call(
        functools.partial(_mlp_kernel, depth=depth, bb=bb, op_dtype=op_dtype),
        out_shape=jax.ShapeDtypeStruct((B, C_out, N_pad), x.dtype),
        grid=grid,
        in_specs=in_specs,
        out_specs=pl.BlockSpec((bb, C_out, tn), lambda b, n: (b, 0, n)),
        compiler_params=pltpu.CompilerParams(
            dimension_semantics=("parallel", "parallel"),
            vmem_limit_bytes=vmem_limit),
        cost_estimate=pl.CostEstimate(
            flops=flops, transcendentals=0, bytes_accessed=bytes_accessed),
    )(x_flat, *params)

    if N_pad != N:
        out_flat = out_flat[..., :N]
    return out_flat.reshape(B, C_out, D, D)


# --------------------------------------------------------------------------
# Reference + test
# --------------------------------------------------------------------------
def _reference_mlp(x, weights, biases):
    """Pure-JAX reference mirroring the PyTorch Conv2d(1x1)+ReLU stack."""
    B, C_in, D, _ = x.shape
    h = x.reshape(B, C_in, D * D).astype(jnp.float32)
    for w, b in zip(weights, biases):
        h = jnp.einsum("oc,bcn->bon", w.astype(jnp.float32), h)
        h = h + b.astype(jnp.float32)[None, :, None]
        h = jnp.maximum(h, 0.0)
    return h.reshape(B, -1, D, D).astype(x.dtype)


if __name__ == "__main__":
    # Small shapes consistent with the module: batch=2, in_channels=4,
    # out_channels=32, spatial D=16, depth_of_mlp=2.
    B, C_in, C_out, D, depth = 2, 4, 32, 16, 2

    key = jax.random.PRNGKey(0)
    keys = jax.random.split(key, 1 + 2 * depth)
    x = jax.random.normal(keys[0], (B, C_in, D, D), dtype=jnp.float32)

    weights, biases = [], []
    c_prev = C_in
    for l in range(depth):
        w = jax.random.normal(keys[1 + 2 * l], (C_out, c_prev),
                              dtype=jnp.float32) / jnp.sqrt(float(c_prev))
        b = 0.1 * jax.random.normal(keys[2 + 2 * l], (C_out,),
                                    dtype=jnp.float32)
        weights.append(w)
        biases.append(b)
        c_prev = C_out

    out = equi2to2_only_mlp(x, weights, biases)
    out = jax.block_until_ready(out)

    ref = _reference_mlp(x, weights, biases)
    assert out.shape == (B, C_out, D, D), f"shape mismatch: {out.shape}"
    assert jnp.allclose(out, ref, atol=1e-5, rtol=1e-5), "value mismatch"

    print("KERNEL_OK")
</pallas_src>

<mosaic_0001>
module attributes {stable_mosaic.version = 11 : i64} {
  func.func @_mlp_kernel(%arg0: i32, %arg1: i32, %arg2: memref<1x4x256xf32, #tpu.memory_space<vmem>>, %arg3: memref<32x4xf32, #tpu.memory_space<vmem>>, %arg4: memref<32x1xf32, #tpu.memory_space<vmem>>, %arg5: memref<32x32xf32, #tpu.memory_space<vmem>>, %arg6: memref<32x1xf32, #tpu.memory_space<vmem>>, %arg7: memref<1x32x256xf32, #tpu.memory_space<vmem>>) attributes {dimension_semantics = [#tpu.dimension_semantics<parallel>, #tpu.dimension_semantics<parallel>], iteration_bounds = array<i64: 2, 1>, scalar_prefetch = 0 : i64, scratch_operands = 0 : i64, tpu.core_type = #tpu.core_type<tc>, window_params = [{transform_indices = @transform_0, window_bounds = array<i64: 1, 4, 256>}, {pipeline_mode = #tpu.pipeline_mode<synchronous>, transform_indices = @transform_1, window_bounds = array<i64: 32, 4>}, {pipeline_mode = #tpu.pipeline_mode<synchronous>, transform_indices = @transform_2, window_bounds = array<i64: 32, 1>}, {pipeline_mode = #tpu.pipeline_mode<synchronous>, transform_indices = @transform_3, window_bounds = array<i64: 32, 32>}, {pipeline_mode = #tpu.pipeline_mode<synchronous>, transform_indices = @transform_4, window_bounds = array<i64: 32, 1>}, {transform_indices = @transform_5, window_bounds = array<i64: 1, 32, 256>}]} {
    %c0 = arith.constant 0 : index
    %c0_0 = arith.constant 0 : index
    %c0_1 = arith.constant 0 : index
    %0 = vector.load %arg2[%c0, %c0_0, %c0_1] : memref<1x4x256xf32, #tpu.memory_space<vmem>>, vector<1x4x256xf32>
    %1 = vector.shape_cast %0 : vector<1x4x256xf32> to vector<4x256xf32>
    %c0_2 = arith.constant 0 : index
    %c0_3 = arith.constant 0 : index
    %2 = vector.load %arg3[%c0_2, %c0_3] : memref<32x4xf32, #tpu.memory_space<vmem>>, vector<32x4xf32>
    %c0_4 = arith.constant 0 : index
    %c0_5 = arith.constant 0 : index
    %3 = vector.load %arg4[%c0_4, %c0_5] : memref<32x1xf32, #tpu.memory_space<vmem>>, vector<32x1xf32>
    %cst = arith.constant dense<0.000000e+00> : vector<32x256xf32>
    %4 = tpu.matmul %2, %1, %cst {dimension_numbers = #tpu.dot_dimension_numbers<[1], [0], [0], [1], [0, 0, 1, 1], [], []>} : vector<32x4xf32>, vector<4x256xf32>, vector<32x256xf32> -> vector<32x256xf32>
    %5 = vector.broadcast %3 : vector<32x1xf32> to vector<32x256xf32>
    %6 = arith.addf %4, %5 : vector<32x256xf32>
    %cst_6 = arith.constant 0.000000e+00 : f32
    %7 = vector.broadcast %cst_6 : f32 to vector<32x256xf32>
    %8 = arith.maximumf %6, %7 : vector<32x256xf32>
    %c0_7 = arith.constant 0 : index
    %c0_8 = arith.constant 0 : index
    %9 = vector.load %arg5[%c0_7, %c0_8] : memref<32x32xf32, #tpu.memory_space<vmem>>, vector<32x32xf32>
    %c0_9 = arith.constant 0 : index
    %c0_10 = arith.constant 0 : index
    %10 = vector.load %arg6[%c0_9, %c0_10] : memref<32x1xf32, #tpu.memory_space<vmem>>, vector<32x1xf32>
    %cst_11 = arith.constant dense<0.000000e+00> : vector<32x256xf32>
    %11 = tpu.matmul %9, %8, %cst_11 {dimension_numbers = #tpu.dot_dimension_numbers<[1], [0], [0], [1], [0, 0, 1, 1], [], []>} : vector<32x32xf32>, vector<32x256xf32>, vector<32x256xf32> -> vector<32x256xf32>
    %12 = vector.broadcast %10 : vector<32x1xf32> to vector<32x256xf32>
    %13 = arith.addf %11, %12 : vector<32x256xf32>
    %cst_12 = arith.constant 0.000000e+00 : f32
    %14 = vector.broadcast %cst_12 : f32 to vector<32x256xf32>
    %15 = arith.maximumf %13, %14 : vector<32x256xf32>
    %c0_13 = arith.constant 0 : index
    %c0_14 = arith.constant 0 : index
    %c0_15 = arith.constant 0 : index
    %16 = vector.load %arg7[%c0_13, %c0_14, %c0_15] : memref<1x32x256xf32, #tpu.memory_space<vmem>>, vector<1x32x256xf32>
    %17 = vector.shape_cast %16 : vector<1x32x256xf32> to vector<32x256xf32>
    %18 = vector.shape_cast %15 : vector<32x256xf32> to vector<1x32x256xf32>
    tpu.vector_store %arg7[%c0_13, %c0_14, %c0_15], %18 {strides = array<i32>} : memref<1x32x256xf32, #tpu.memory_space<vmem>>, vector<1x32x256xf32>,
    return
  }
  func.func @transform_0(%arg0: i32, %arg1: i32) -> (i32, i32, i32) {
    %c0_i32 = arith.constant 0 : i32
    %c0_i32_0 = arith.constant 0 : i32
    return %arg0, %c0_i32, %arg1 : i32, i32, i32
  }
  func.func @transform_1(%arg0: i32, %arg1: i32) -> (i32, i32) {
    %c0_i32 = arith.constant 0 : i32
    %c0_i32_0 = arith.constant 0 : i32
    %c0_i32_1 = arith.constant 0 : i32
    return %c0_i32, %c0_i32_0 : i32, i32
  }
  func.func @transform_2(%arg0: i32, %arg1: i32) -> (i32, i32) {
    %c0_i32 = arith.constant 0 : i32
    %c0_i32_0 = arith.constant 0 : i32
    %c0_i32_1 = arith.constant 0 : i32
    return %c0_i32, %c0_i32_0 : i32, i32
  }
  func.func @transform_3(%arg0: i32, %arg1: i32) -> (i32, i32) {
    %c0_i32 = arith.constant 0 : i32
    %c0_i32_0 = arith.constant 0 : i32
    %c0_i32_1 = arith.constant 0 : i32
    return %c0_i32, %c0_i32_0 : i32, i32
  }
  func.func @transform_4(%arg0: i32, %arg1: i32) -> (i32, i32) {
    %c0_i32 = arith.constant 0 : i32
    %c0_i32_0 = arith.constant 0 : i32
    %c0_i32_1 = arith.constant 0 : i32
    return %c0_i32, %c0_i32_0 : i32, i32
  }
  func.func @transform_5(%arg0: i32, %arg1: i32) -> (i32, i32, i32) {
    %c0_i32 = arith.constant 0 : i32
    %c0_i32_0 = arith.constant 0 : i32
    return %arg0, %c0_i32, %arg1 : i32, i32, i32
  }
}

</mosaic_0001>

<llo_original>
// kernel: tpu_custom_call.1
$region0: #{tpu_custom_call.1}
  #allocation0 [shape = 'u32[]', space=smem, size = 0x4, offset = 0x4, fixed_abs, tag = 'smem constant byte address 0x4 - core index']
  #allocation1 [shape = 'u32[72,128]{1,0:T(1,128)}', space=vmem, size = 0x9000, scoped, tag = 'internal scratch']
  %s0 = inlined_call_operand.vmem [shape: f32[2,4,256], index: 0, kind: input, shape index: {}]
  %s1 = inlined_call_operand.vmem [shape: f32[32,4], index: 1, kind: input, shape index: {}]
  %s2 = inlined_call_operand.vmem [shape: f32[32,1], index: 2, kind: input, shape index: {}]
  %s3 = inlined_call_operand.vmem [shape: f32[32,32], index: 3, kind: input, shape index: {}]
  %s4 = inlined_call_operand.vmem [shape: f32[32,1], index: 4, kind: input, shape index: {}]
  %s5 = inlined_call_operand.hbm [shape: f32[2,32,256], index: 5, kind: output, shape index: {}]
  %s6 = sld [smem:[#allocation0]]
  $region53: #{tpu_custom_call.1} parent=0
    _
  %s8 = ssub.s32 1, %s6
  %s9 = scalar_select 0, %s8, %s6
  $region1: #{tpu_custom_call.1} parent=0
    #allocation2 [shape = 'u8[65536]{0}', space=vmem, size = 0x10000, scoped, tag = 'output window, operand 0']
    #allocation3 [shape = 's32[2]{0}', space=sflag, size = 0x8, scoped, tag = 'scoped memory for tpu_custom_call.1']
    %10 = vsyncpa [#allocation3], 0
    %s11 = scalar_lea.sflag [#allocation3], 1
    %12 = vsyncpa %s11, 0
    loop: start=0, step=1, limit=4
    $region2: #{tpu_custom_call.1} parent=1 // loop_pre_header
      _
    $region3: #{tpu_custom_call.1} parent=1 // loop_header
      %s14 = sphi 0, %s18
      %p15 = scmp.ge.s32.totalorder %s14, 4
      %s21 = sphi 0, %s33
      %s22 = sphi 0, %s29
      %s23 = sphi 0, %s21
      %s24 = sphi 0, %s22
      %s25 = sphi 0, %s23
      %s26 = sphi 0, %s24
      %s38 = sphi 0, %s40
      %s41 = sphi 0, %s38
      %s42 = sphi 0, %s41
      %s58 = sphi 0, %s42
      %s62 = sphi 0, %s62
      %s64 = sphi 0, %s62
      %s65 = sphi 0, %s64
      %s79 = sphi 0, %s65
      %s83 = sphi 0, %s83
      %s85 = sphi 0, %s83
      %s86 = sphi 0, %s85
      %s100 = sphi 0, %s86
      %s104 = sphi 0, %s104
      %s106 = sphi 0, %s104
      %s107 = sphi 0, %s106
      %s121 = sphi 0, %s107
      %s125 = sphi 0, %s125
      %s127 = sphi 0, %s125
      %s128 = sphi 0, %s127
      %s142 = sphi 0, %s128
      %s150 = sphi 0, %s152
      %s153 = sphi 0, %s150
      %s154 = sphi 0, %s153
      %s170 = sphi 0, %s154
    $region4: #{tpu_custom_call.1} parent=1 // loop_header_branch
      %17 = sbr.rel (%p15) target = $region8
    $region5: #{tpu_custom_call.1} parent=1 // loop_body
      %s19 = ssub.s32 %s14, 1
      %s20 = ssub.s32 %s14, 2
      %s27 = sadd.s32 1, %s22
      %p28 = scmp.ge.s32.totalorder %s27, 1
      %s29 = scalar_select %p28, 0, %s27
      %s30 = sadd.s32 1, %s21
      %s31 = scalar_select %p28, %s30, %s21
      %p32 = scmp.ge.s32.totalorder %s31, 2
      %s33 = scalar_select %p32, 0, %s31
      %s34 = ssub.s32 %s21, %s33
      %s35 = ssub.s32 %s22, %s29
      %s36 = sor.u32 %s34, %s35
      %p37 = scmp.eq.s32.totalorder %s36, 0
      %s39 = sadd.s32 %s38, 1
      %s40 = scalar_select %p37, %s38, %s39
      %p43 = pneg %p37
      %p44 = scmp.eq.s32.totalorder %s14, 1
      %p45 = por %p43, %p44
      %p46 = scmp.ne.s32.totalorder %s38, %s41
      %p47 = scmp.eq.s32.totalorder %s14, 0
      %p48 = por %p46, %p47
      %p49 = scmp.ne.s32.totalorder %s38, %s41
      %p50 = scmp.eq.s32.totalorder %s19, 1
      %p51 = por %p49, %p50
      %p52 = scmp.ne.s32.totalorder %s41, %s42
      %p53 = scmp.eq.s32.totalorder %s19, 0
      %p54 = por %p52, %p53
      %p55 = scmp.ne.s32.totalorder %s41, %s42
      %p56 = scmp.eq.s32.totalorder %s20, 1
      %p57 = por %p55, %p56
      %p59 = scmp.ne.s32.totalorder %s42, %s58
      %p60 = scmp.eq.s32.totalorder %s20, 0
      %p61 = por %p59, %p60
      %s63 = sadd.s32 %s62, 1
      %p66 = scmp.eq.s32.totalorder %s14, 1
      %p67 = scmp.ne.s32.totalorder %s62, %s64
      %p68 = scmp.eq.s32.totalorder %s14, 0
      %p69 = por %p67, %p68
      %p70 = scmp.ne.s32.totalorder %s62, %s64
      %p71 = scmp.eq.s32.totalorder %s19, 1
      %p72 = por %p70, %p71
      %p73 = scmp.ne.s32.totalorder %s64, %s65
      %p74 = scmp.eq.s32.totalorder %s19, 0
      %p75 = por %p73, %p74
      %p76 = scmp.ne.s32.totalorder %s64, %s65
      %p77 = scmp.eq.s32.totalorder %s20, 1
      %p78 = por %p76, %p77
      %p80 = scmp.ne.s32.totalorder %s65, %s79
      %p81 = scmp.eq.s32.totalorder %s20, 0
      %p82 = por %p80, %p81
      %s84 = sadd.s32 %s83, 1
      %p87 = scmp.eq.s32.totalorder %s14, 1
      %p88 = scmp.ne.s32.totalorder %s83, %s85
      %p89 = scmp.eq.s32.totalorder %s14, 0
      %p90 = por %p88, %p89
      %p91 = scmp.ne.s32.totalorder %s83, %s85
      %p92 = scmp.eq.s32.totalorder %s19, 1
      %p93 = por %p91, %p92
      %p94 = scmp.ne.s32.totalorder %s85, %s86
      %p95 = scmp.eq.s32.totalorder %s19, 0
      %p96 = por %p94, %p95
      %p97 = scmp.ne.s32.totalorder %s85, %s86
      %p98 = scmp.eq.s32.totalorder %s20, 1
      %p99 = por %p97, %p98
      %p101 = scmp.ne.s32.totalorder %s86, %s100
      %p102 = scmp.eq.s32.totalorder %s20, 0
      %p103 = por %p101, %p102
      %s105 = sadd.s32 %s104, 1
      %p108 = scmp.eq.s32.totalorder %s14, 1
      %p109 = scmp.ne.s32.totalorder %s104, %s106
      %p110 = scmp.eq.s32.totalorder %s14, 0
      %p111 = por %p109, %p110
      %p112 = scmp.ne.s32.totalorder %s104, %s106
      %p113 = scmp.eq.s32.totalorder %s19, 1
      %p114 = por %p112, %p113
      %p115 = scmp.ne.s32.totalorder %s106, %s107
      %p116 = scmp.eq.s32.totalorder %s19, 0
      %p117 = por %p115, %p116
      %p118 = scmp.ne.s32.totalorder %s106, %s107
      %p119 = scmp.eq.s32.totalorder %s20, 1
      %p120 = por %p118, %p119
      %p122 = scmp.ne.s32.totalorder %s107, %s121
      %p123 = scmp.eq.s32.totalorder %s20, 0
      %p124 = por %p122, %p123
      %s126 = sadd.s32 %s125, 1
      %p129 = scmp.eq.s32.totalorder %s14, 1
      %p130 = scmp.ne.s32.totalorder %s125, %s127
      %p131 = scmp.eq.s32.totalorder %s14, 0
      %p132 = por %p130, %p131
      %p133 = scmp.ne.s32.totalorder %s125, %s127
      %p134 = scmp.eq.s32.totalorder %s19, 1
      %p135 = por %p133, %p134
      %p136 = scmp.ne.s32.totalorder %s127, %s128
      %p137 = scmp.eq.s32.totalorder %s19, 0
      %p138 = por %p136, %p137
      %p139 = scmp.ne.s32.totalorder %s127, %s128
      %p140 = scmp.eq.s32.totalorder %s20, 1
      %p141 = por %p139, %p140
      %p143 = scmp.ne.s32.totalorder %s128, %s142
      %p144 = scmp.eq.s32.totalorder %s20, 0
      %p145 = por %p143, %p144
      %s146 = ssub.s32 %s21, %s33
      %s147 = ssub.s32 %s22, %s29
      %s148 = sor.u32 %s146, %s147
      %p149 = scmp.eq.s32.totalorder %s148, 0
      %s151 = sadd.s32 %s150, 1
      %s152 = scalar_select %p149, %s150, %s151
      %p155 = pneg %p149
      %p156 = scmp.eq.s32.totalorder %s14, 1
      %p157 = por %p155, %p156
      %p158 = scmp.ne.s32.totalorder %s150, %s153
      %p159 = scmp.eq.s32.totalorder %s14, 0
      %p160 = por %p158, %p159
      %p161 = scmp.ne.s32.totalorder %s150, %s153
      %p162 = scmp.eq.s32.totalorder %s19, 1
      %p163 = por %p161, %p162
      %p164 = scmp.ne.s32.totalorder %s153, %s154
      %p165 = scmp.eq.s32.totalorder %s19, 0
      %p166 = por %p164, %p165
      %p167 = scmp.ne.s32.totalorder %s153, %s154
      %p168 = scmp.eq.s32.totalorder %s20, 1
      %p169 = por %p167, %p168
      %p171 = scmp.ne.s32.totalorder %s154, %s170
      %p172 = scmp.eq.s32.totalorder %s20, 0
      %p173 = por %p171, %p172
      %p174 = scmp.le.s32.totalorder 1, %s14
      %p175 = scmp.lt.s32.totalorder %s14, 3
      %p176 = pnand %p174, %p175
      %p177 = pneg %p176
      // Predicated region
      $region9: #{tpu_custom_call.1} parent=5 // pred_check
        _
      $region10: #{tpu_custom_call.1} parent=5 // pred_check_branch
        %179 = sbr.rel (%p176) target = $region12
      $region11: #{tpu_custom_call.1} parent=5 // pred_region
        %s180 = ssub.s32 %s14, 1
        // Predicated region
        $region13: #{tpu_custom_call.1} parent=11 // pred_check
          %p181 = pneg %p75
        $region14: #{tpu_custom_call.1} parent=11 // pred_check_branch
          %183 = sbr.rel (%p181) target = $region16
        $region15: #{tpu_custom_call.1} parent=11 // pred_region
          _
        $region16: #{tpu_custom_call.1} parent=11 // pred_fallthru
          _
        // Predicated region
        $region17: #{tpu_custom_call.1} parent=11 // pred_check
          %p184 = pneg %p96
        $region18: #{tpu_custom_call.1} parent=11 // pred_check_branch
          %186 = sbr.rel (%p184) target = $region20
        $region19: #{tpu_custom_call.1} parent=11 // pred_region
          _
        $region20: #{tpu_custom_call.1} parent=11 // pred_fallthru
          _
        // Predicated region
        $region21: #{tpu_custom_call.1} parent=11 // pred_check
          %p187 = pneg %p117
        $region22: #{tpu_custom_call.1} parent=11 // pred_check_branch
          %189 = sbr.rel (%p187) target = $region24
        $region23: #{tpu_custom_call.1} parent=11 // pred_region
          _
        $region24: #{tpu_custom_call.1} parent=11 // pred_fallthru
          _
        // Predicated region
        $region25: #{tpu_custom_call.1} parent=11 // pred_check
          %p190 = pneg %p138
        $region26: #{tpu_custom_call.1} parent=11 // pred_check_branch
          %192 = sbr.rel (%p190) target = $region28
        $region27: #{tpu_custom_call.1} parent=11 // pred_region
          _
        $region28: #{tpu_custom_call.1} parent=11 // pred_fallthru
          _
      $region12: #{tpu_custom_call.1} parent=5 // pred_fallthru
        _
      %p193 = scmp.lt.s32.totalorder %s14, 2
      // Predicated region
      $region29: #{tpu_custom_call.1} parent=5 // pred_check
        %p194 = pneg %p193
      $region30: #{tpu_custom_call.1} parent=5 // pred_check_branch
        %196 = sbr.rel (%p194) target = $region32
      $region31: #{tpu_custom_call.1} parent=5 // pred_region
        // Predicated region
        $region33: #{tpu_custom_call.1} parent=31 // pred_check
          %p197 = pneg %p48
        $region34: #{tpu_custom_call.1} parent=31 // pred_check_branch
          %199 = sbr.rel (%p197) target = $region36
        $region35: #{tpu_custom_call.1} parent=31 // pred_region
          %s200 = smul.u32 2, %s22
          %p201 = scmp.lt.s32.totalorder %s21, 1
          %s202 = scalar_select %p201, %s21, 1
          %p203 = scmp.lt.s32.totalorder %s200, 1
          %s204 = scalar_select %p203, %s200, 1
          %s205 = smul.addr %s202, 2
          %s206 = sadd.s32 %s204, %s205
          %s207 = smul.addr %s206, 4
          %s208 = scalar_lea.vmem %s0, %s207
          %s209 = smul.u32 2, %s22
        $region36: #{tpu_custom_call.1} parent=31 // pred_fallthru
          _
      $region32: #{tpu_custom_call.1} parent=5 // pred_fallthru
        _
      %p210 = scmp.le.s32.totalorder 1, %s14
      %p211 = scmp.lt.s32.totalorder %s14, 3
      %p212 = pnand %p210, %p211
      %p213 = pneg %p212
      // Predicated region
      $region37: #{tpu_custom_call.1} parent=5 // pred_check
        _
      $region38: #{tpu_custom_call.1} parent=5 // pred_check_branch
        %215 = sbr.rel (%p212) target = $region40
      $region39: #{tpu_custom_call.1} parent=5 // pred_region
        %s216 = ssub.s32 %s14, 1
        %s217 = smul.u32 2, %s24
        %p218 = scmp.lt.s32.totalorder %s23, 1
        %s219 = scalar_select %p218, %s23, 1
        %p220 = scmp.lt.s32.totalorder %s217, 1
        %s221 = scalar_select %p220, %s217, 1
        %s222 = smul.addr %s219, 2
        %s223 = sadd.s32 %s221, %s222
        %s224 = smul.addr %s223, 4
        %s225 = scalar_lea.vmem %s0, %s224
        %p226 = pneg %p54
        %p227 = pneg %p51
        %p228 = pneg %p75
        %p229 = pneg %p72
        %p230 = pneg %p96
        %p231 = pneg %p93
        %p232 = pneg %p117
        %p233 = pneg %p114
        %p234 = pneg %p138
        %p235 = pneg %p135
        %p236 = pneg %p166
        %p237 = pneg %p163
        %s238 = sand.u32 %s153, 1
        %s239 = scalar_lea.sflag [#allocation3], %s238
        %s240 = sand.u32 %s153, 1
        %s241 = smul.addr %s240, 64
        %s242 = scalar_lea.vmem [#allocation2], %s241
        %s243 = smul.u32 2, %s24
        %p244 = scmp.lt.s32.totalorder %s23, 1
        %s245 = scalar_select %p244, %s23, 1
        %p246 = scmp.lt.s32.totalorder %s243, 1
        %s247 = scalar_select %p246, %s243, 1
        %s248 = smul.addr %s245, 2
        %s249 = sadd.s32 %s247, %s248
        %s250 = smul.addr %s249, 4
        %s251 = scalar_lea.vmem %s0, %s250
        %s252 = smul.u32 2, %s24
        %s253 = smul.u32 2, %s24
        %v254 = vld [vmem:[%s251] sm:$0xff]
        %v255 = vld [vmem:[%s1] sm:$0xff]
        %v256 = vld [vmem:[%s1 + $0x8] sm:$0xff]
        %v257 = vld [vmem:[%s1 + $0x10] sm:$0xff]
        %v258 = vld [vmem:[%s1 + $0x18] sm:$0xff]
        %v259 = vld [vmem:[%s2] sm:$0xff]
        %v260 = vld [vmem:[%s2 + $0x8] sm:$0xff]
        %v261 = vld [vmem:[%s2 + $0x10] sm:$0xff]
        %v262 = vld [vmem:[%s2 + $0x18] sm:$0xff]
        %264 = vset.pattern.permute.xlu0 0
        %265 = vperm.xlu0 %264, %v259
        %v266 = vpop.permute.xlu0 %265
        %269 = vset.pattern.permute.xlu0 0
        %270 = vperm.xlu0 %269, %v260
        %v271 = vpop.permute.xlu0 %270
        %274 = vset.pattern.permute.xlu0 0
        %275 = vperm.xlu0 %274, %v261
        %v276 = vpop.permute.xlu0 %275
        %279 = vset.pattern.permute.xlu0 0
        %280 = vperm.xlu0 %279, %v262
        %v281 = vpop.permute.xlu0 %280
        %284 = vst [vmem:[#allocation1] ss:$2 sm:$0xff] %v254
        %v285 = vld.sshfl [vmem:[#allocation1] sm:$0xff pattern:$0x75316420]
        %v286 = vld.sshfl [vmem:[#allocation1 + $0x8] sm:$0xff pattern:$0x75316420]
        %vm287 = vcmask 31744
        %v289 = vsel %vm287, %v255, 0
        %v292 = vsel %vm287, %v256, 0
        %v295 = vsel %vm287, %v257, 0
        %v298 = vsel %vm287, %v258, 0
        %vm300 = vcmask 1043456
        %v301 = vsel %vm300, %v285, 0
        %v303 = vsel %vm300, %v286, 0
        %305 = vmatpush.msra.mxu0 0.0
        %306 = vmatpush.msra.mxu0 0.0
        %307 = vmatpush.msra.mxu0 0.0
        %308 = vmatpush.msra.mxu0 0.0
        %309 = vmatpush.msra.mxu0 0.0
        %310 = vmatpush.msra.mxu0 0.0
        %311 = vmatpush.msra.mxu0 0.0
        %312 = vmatpush.msra.mxu0 0.0
        %313 = vmatpush.msra.mxu0 0.0
        %314 = vmatpush.msra.mxu0 0.0
        %315 = vmatpush.msra.mxu0 0.0
        %316 = vmatpush.msra.mxu0 0.0
        %317 = vmatpush.msra.mxu0 0.0
        %318 = vmatpush.msra.mxu0 0.0
        %319 = vmatpush.msra.mxu0 0.0
        %320 = vmatpush.msra.mxu0 %v301
        %321 = vmatmul.f32.gmra.mxu0 %v289
        %v322 = vpop.f32.mrf.mxu0
        %v323 = vadd.f32 %v266, %v322
        %324 = vmatmul.f32.gmra.mxu0 %v292
        %v325 = vpop.f32.mrf.mxu0
        %v326 = vadd.f32 %v271, %v325
        %327 = vmatmul.f32.gmra.mxu0 %v295
        %v328 = vpop.f32.mrf.mxu0
        %v329 = vadd.f32 %v276, %v328
        %330 = vmatmul.f32.gmra.mxu0 %v298
        %v331 = vpop.f32.mrf.mxu0
        %v332 = vadd.f32 %v281, %v331
        %333 = vdwg.mxu0
        %334 = vmatpush.msra.mxu0 0.0
        %335 = vmatpush.msra.mxu0 0.0
        %336 = vmatpush.msra.mxu0 0.0
        %337 = vmatpush.msra.mxu0 0.0
        %338 = vmatpush.msra.mxu0 0.0
        %339 = vmatpush.msra.mxu0 0.0
        %340 = vmatpush.msra.mxu0 0.0
        %341 = vmatpush.msra.mxu0 0.0
        %342 = vmatpush.msra.mxu0 0.0
        %343 = vmatpush.msra.mxu0 0.0
        %344 = vmatpush.msra.mxu0 0.0
        %345 = vmatpush.msra.mxu0 0.0
        %346 = vmatpush.msra.mxu0 0.0
        %347 = vmatpush.msra.mxu0 0.0
        %348 = vmatpush.msra.mxu0 0.0
        %349 = vmatpush.msra.mxu0 %v303
        %350 = vmatmul.f32.gmra.mxu0 %v289
        %v351 = vpop.f32.mrf.mxu0
        %v352 = vadd.f32 %v266, %v351
        %353 = vmatmul.f32.gmra.mxu0 %v292
        %v354 = vpop.f32.mrf.mxu0
        %v355 = vadd.f32 %v271, %v354
        %356 = vmatmul.f32.gmra.mxu0 %v295
        %v357 = vpop.f32.mrf.mxu0
        %v358 = vadd.f32 %v276, %v357
        %359 = vmatmul.f32.gmra.mxu0 %v298
        %v360 = vpop.f32.mrf.mxu0
        %v361 = vadd.f32 %v281, %v360
        %362 = vdwg.mxu0
        %v363 = vmax.f32 %v323, 0.0
        %v364 = vmax.f32 %v352, 0.0
        %v365 = vmax.f32 %v326, 0.0
        %v366 = vmax.f32 %v355, 0.0
        %v367 = vmax.f32 %v329, 0.0
        %v368 = vmax.f32 %v358, 0.0
        %v369 = vmax.f32 %v332, 0.0
        %v370 = vmax.f32 %v361, 0.0
        %v371 = vld [vmem:[%s3] sm:$0xff]
        %v372 = vld [vmem:[%s3 + $0x8] sm:$0xff]
        %v373 = vld [vmem:[%s3 + $0x10] sm:$0xff]
        %v374 = vld [vmem:[%s3 + $0x18] sm:$0xff]
        %v375 = vld [vmem:[%s4] sm:$0xff]
        %v376 = vld [vmem:[%s4 + $0x8] sm:$0xff]
        %v377 = vld [vmem:[%s4 + $0x10] sm:$0xff]
        %v378 = vld [vmem:[%s4 + $0x18] sm:$0xff]
        %380 = vset.pattern.permute.xlu0 0
        %381 = vperm.xlu0 %380, %v375
        %v382 = vpop.permute.xlu0 %381
        %385 = vset.pattern.permute.xlu0 0
        %386 = vperm.xlu0 %385, %v376
        %v387 = vpop.permute.xlu0 %386
        %390 = vset.pattern.permute.xlu0 0
        %391 = vperm.xlu0 %390, %v377
        %v392 = vpop.permute.xlu0 %391
        %395 = vset.pattern.permute.xlu0 0
        %396 = vperm.xlu0 %395, %v378
        %v397 = vpop.permute.xlu0 %396
        %vm399 = vcmask 261120
        %v401 = vsel %vm399, %v371, 0
        %v404 = vsel %vm399, %v372, 0
        %v407 = vsel %vm399, %v373, 0
        %v410 = vsel %vm399, %v374, 0
        %412 = vmatpush.msra.mxu0 0.0
        %413 = vmatpush.msra.mxu0 0.0
        %414 = vmatpush.msra.mxu0 0.0
        %415 = vmatpush.msra.mxu0 0.0
        %416 = vmatpush.msra.mxu0 0.0
        %417 = vmatpush.msra.mxu0 0.0
        %418 = vmatpush.msra.mxu0 0.0
        %419 = vmatpush.msra.mxu0 0.0
        %420 = vmatpush.msra.mxu0 0.0
        %421 = vmatpush.msra.mxu0 0.0
        %422 = vmatpush.msra.mxu0 0.0
        %423 = vmatpush.msra.mxu0 0.0
        %424 = vmatpush.msra.mxu0 %v369
        %425 = vmatpush.msra.mxu0 %v367
        %426 = vmatpush.msra.mxu0 %v365
        %427 = vmatpush.msra.mxu0 %v363
        %428 = vmatmul.f32.gmra.mxu0 %v401
        %v429 = vpop.f32.mrf.mxu0
        %v430 = vadd.f32 %v382, %v429
        %431 = vmatmul.f32.gmra.mxu0 %v404
        %v432 = vpop.f32.mrf.mxu0
        %v433 = vadd.f32 %v387, %v432
        %434 = vmatmul.f32.gmra.mxu0 %v407
        %v435 = vpop.f32.mrf.mxu0
        %v436 = vadd.f32 %v392, %v435
        %437 = vmatmul.f32.gmra.mxu0 %v410
        %v438 = vpop.f32.mrf.mxu0
        %v439 = vadd.f32 %v397, %v438
        %440 = vdwg.mxu0
        %441 = vmatpush.msra.mxu0 0.0
        %442 = vmatpush.msra.mxu0 0.0
        %443 = vmatpush.msra.mxu0 0.0
        %444 = vmatpush.msra.mxu0 0.0
        %445 = vmatpush.msra.mxu0 0.0
        %446 = vmatpush.msra.mxu0 0.0
        %447 = vmatpush.msra.mxu0 0.0
        %448 = vmatpush.msra.mxu0 0.0
        %449 = vmatpush.msra.mxu0 0.0
        %450 = vmatpush.msra.mxu0 0.0
        %451 = vmatpush.msra.mxu0 0.0
        %452 = vmatpush.msra.mxu0 0.0
        %453 = vmatpush.msra.mxu0 %v370
        %454 = vmatpush.msra.mxu0 %v368
        %455 = vmatpush.msra.mxu0 %v366
        %456 = vmatpush.msra.mxu0 %v364
        %457 = vmatmul.f32.gmra.mxu0 %v401
        %v458 = vpop.f32.mrf.mxu0
        %v459 = vadd.f32 %v382, %v458
        %460 = vmatmul.f32.gmra.mxu0 %v404
        %v461 = vpop.f32.mrf.mxu0
        %v462 = vadd.f32 %v387, %v461
        %463 = vmatmul.f32.gmra.mxu0 %v407
        %v464 = vpop.f32.mrf.mxu0
        %v465 = vadd.f32 %v392, %v464
        %466 = vmatmul.f32.gmra.mxu0 %v410
        %v467 = vpop.f32.mrf.mxu0
        %v468 = vadd.f32 %v397, %v467
        %469 = vdwg.mxu0
        %v470 = vmax.f32 %v430, 0.0
        %v471 = vmax.f32 %v459, 0.0
        %v472 = vmax.f32 %v433, 0.0
        %v473 = vmax.f32 %v462, 0.0
        %v474 = vmax.f32 %v436, 0.0
        %v475 = vmax.f32 %v465, 0.0
        %v476 = vmax.f32 %v439, 0.0
        %v477 = vmax.f32 %v468, 0.0
        %478 = vst [vmem:[%s242] sm:$0xff] %v470
        %479 = vst [vmem:[%s242 + $0x8] sm:$0xff] %v471
        %480 = vst [vmem:[%s242 + $0x10] sm:$0xff] %v472
        %481 = vst [vmem:[%s242 + $0x18] sm:$0xff] %v473
        %482 = vst [vmem:[%s242 + $0x20] sm:$0xff] %v474
        %483 = vst [vmem:[%s242 + $0x28] sm:$0xff] %v475
        %484 = vst [vmem:[%s242 + $0x30] sm:$0xff] %v476
        %485 = vst [vmem:[%s242 + $0x38] sm:$0xff] %v477
        %s486 = sand.u32 %s153, 1
        %s487 = scalar_lea.sflag [#allocation3], %s486
        %s488 = sand.u32 %s153, 1
        %s489 = smul.addr %s488, 64
        %s490 = scalar_lea.vmem [#allocation2], %s489
        // Predicated region
        $region41: #{tpu_custom_call.1} parent=39 // pred_check
          %p491 = pneg %p163
        $region42: #{tpu_custom_call.1} parent=39 // pred_check_branch
          %493 = sbr.rel (%p491) target = $region44
        $region43: #{tpu_custom_call.1} parent=39 // pred_region
          %s494 = smul.u32 2, %s24
          %496 = vsyncadd %s487, 0
          %s497 = smul.addr %s23, 8
          %s498 = sadd.s32 %s494, %s497
          %s499 = smul.addr %s498, 8
          %s500 = scalar_lea.hbm %s5, %s499
          %s501 = sshll.u32 %s490, 4
          %s502 = int_to_ptr.vmem [resolvable:$true] %s501
          %s503 = sshll.u32 %s500, 4
          %s504 = int_to_ptr.hbm [resolvable:$true] %s503
          %509 = dma.vmem_to_hbm [thread:$0]  %s502, 1024, %s504, %s487, 256, 256, 16
        $region44: #{tpu_custom_call.1} parent=39 // pred_fallthru
          _
      $region40: #{tpu_custom_call.1} parent=5 // pred_fallthru
        _
      %p510 = scmp.le.s32.totalorder 2, %s14
      // Predicated region
      $region45: #{tpu_custom_call.1} parent=5 // pred_check
        %p511 = pneg %p510
      $region46: #{tpu_custom_call.1} parent=5 // pred_check_branch
        %513 = sbr.rel (%p511) target = $region48
      $region47: #{tpu_custom_call.1} parent=5 // pred_region
        %s514 = ssub.s32 %s14, 2
        // Predicated region
        $region49: #{tpu_custom_call.1} parent=47 // pred_check
          %p515 = pneg %p169
        $region50: #{tpu_custom_call.1} parent=47 // pred_check_branch
          %517 = sbr.rel (%p515) target = $region52
        $region51: #{tpu_custom_call.1} parent=47 // pred_region
          %s518 = sand.u32 %s154, 1
          %s519 = scalar_lea.sflag [#allocation3], %s518
          %s520 = sand.u32 %s154, 1
          %s521 = smul.addr %s520, 64
          %s522 = scalar_lea.vmem [#allocation2], %s521
          %524 = dma.done %s519, 1024
        $region52: #{tpu_custom_call.1} parent=47 // pred_fallthru
          _
      $region48: #{tpu_custom_call.1} parent=5 // pred_fallthru
        _
    $region6: #{tpu_custom_call.1} parent=1 // loop_footer
      %s18 = sadd.s32 1, %s14
    $region7: #{tpu_custom_call.1} parent=1 // loop_footer_branch
      %13 = sbr.rel target = $region3
    $region8: #{tpu_custom_call.1} parent=1 // loop_exit
      _
    %525 = vsyncpa [#allocation3], 1
    %s526 = scalar_lea.sflag [#allocation3], 1
    %527 = vsyncpa %s526, 1

</llo_original>
